<compile_context>
chip_gen: v6e
topology: v6e:2x2x1
jax: 0.10.0
libtpu: 0.0.40
codegen_flags: <defaults>
</compile_context>

<pallas_src>
import jax
import jax.numpy as jnp
from jax import lax
from jax.experimental import pallas as pl
from jax.experimental.pallas import tpu as pltpu

# forward() hard-codes torch.zeros(1, 59) in the "input" slot of the i2h branch,
# so input_size must be 59 for the module to be self-consistent.
# `all_categories` is elided in the spec; 18 is the standard char-rnn tutorial value.
N_CATEGORIES = 18
INPUT_SIZE = 59
HIDDEN_SIZE = 32
OUTPUT_SIZE = 16


def _iii_rnn_seq_kernel(
    cat_h_ref, cat_o_ref, h0_ref, x_ref,          # (1,H), (1,O), (1,H), (T,I)
    wih_h_ref,                                     # i2h hidden block: (H,H)
    wio_i_ref, wio_h_ref,                          # i2o input/hidden blocks: (I,O), (H,O)
    woo_h_ref, woo_o_ref, boo_ref,                 # o2o: (H,O), (O,O), (1,O)
    out_ref, hid_ref,                              # outputs: (T,O), (T,H)
    hprev_scr,                                     # VMEM scratch: (T,H) previous hiddens
):
    T = hid_ref.shape[0]

    cat_h = cat_h_ref[...]        # (1, H) : category @ W_i2h_cat + b_i2h (hoisted)
    wih_h = wih_h_ref[...]        # (H, H)

    # ---- Phase 1: sequential hidden recurrence (only truly serial work) ------
    # h_t = cat_h + h_{t-1} @ W_hh   (the zeros(1,59) input block is elided).
    def step(t, h):
        hprev_scr[pl.ds(t, 1), :] = h
        h_new = cat_h + jnp.dot(h, wih_h, preferred_element_type=jnp.float32)
        hid_ref[pl.ds(t, 1), :] = h_new
        return h_new

    lax.fori_loop(0, T, step, h0_ref[...], unroll=True)

    # ---- Phase 2: batched (over T) output path --------------------------------
    h_prev = hprev_scr[...]       # (T, H)  hidden fed into step t
    h_new = hid_ref[...]          # (T, H)  hidden produced by step t
    x = x_ref[...]                # (T, I)

    # output = i2o(cat(category, input, hidden_prev))
    o1 = (cat_o_ref[...]
          + jnp.dot(x, wio_i_ref[...], preferred_element_type=jnp.float32)
          + jnp.dot(h_prev, wio_h_ref[...], preferred_element_type=jnp.float32))

    # output = o2o(cat(hidden_new, output))
    o2 = (jnp.dot(h_new, woo_h_ref[...], preferred_element_type=jnp.float32)
          + jnp.dot(o1, woo_o_ref[...], preferred_element_type=jnp.float32)
          + boo_ref[...])

    # TODO(synk): nn.Dropout(0.1) is stochastic in train mode; implemented here
    # as eval-mode identity (deterministic forward).

    # output = LogSoftmax(dim=1)(output)  -- max-shifted, computed for all T rows.
    m = jnp.max(o2, axis=1, keepdims=True)
    shifted = o2 - m
    out_ref[...] = shifted - jnp.log(jnp.sum(jnp.exp(shifted), axis=1,
                                             keepdims=True))


def make_params(key, input_size=INPUT_SIZE, hidden_size=HIDDEN_SIZE,
                output_size=OUTPUT_SIZE, n_categories=N_CATEGORIES):
    """Deterministic PyTorch-Linear-style init; weights stored (in, out)."""
    def linear(k, fan_in, fan_out):
        k1, k2 = jax.random.split(k)
        bound = float(fan_in) ** -0.5
        w = jax.random.uniform(k1, (fan_in, fan_out), jnp.float32, -bound, bound)
        b = jax.random.uniform(k2, (1, fan_out), jnp.float32, -bound, bound)
        return w, b

    k1, k2, k3 = jax.random.split(key, 3)
    comb = n_categories + input_size + hidden_size
    w_i2h, b_i2h = linear(k1, comb, hidden_size)
    w_i2o, b_i2o = linear(k2, comb, output_size)
    w_o2o, b_o2o = linear(k3, hidden_size + output_size, output_size)
    return dict(w_i2h=w_i2h, b_i2h=b_i2h, w_i2o=w_i2o, b_i2o=b_i2o,
                w_o2o=w_o2o, b_o2o=b_o2o)


def split_params(params, n_categories=N_CATEGORIES, input_size=INPUT_SIZE,
                 hidden_size=HIDDEN_SIZE):
    """Split the concatenated Linear weights ONCE (not per kernel call)."""
    C, I, H = n_categories, input_size, hidden_size
    w_i2h, w_i2o, w_o2o = params["w_i2h"], params["w_i2o"], params["w_o2o"]
    return dict(
        # i2h's input block is never used (forward feeds zeros there) -> dropped.
        wih_c=w_i2h[:C], wih_h=w_i2h[C + I:], b_i2h=params["b_i2h"],
        wio_c=w_i2o[:C], wio_i=w_i2o[C:C + I], wio_h=w_i2o[C + I:],
        b_i2o=params["b_i2o"],
        woo_h=w_o2o[:H], woo_o=w_o2o[H:], b_o2o=params["b_o2o"],
    )


def _iii_rnn_sequence(category, xs, h0, kp):
    """Run T forward steps of iii_RNN in one fused pallas_call.

    Args:
      category: (1, C) one-hot, constant over the sequence.
      xs:       (T, 1, I) per-step inputs.
      h0:       (1, H) initial hidden.
      kp:       split_params() dict.
    Returns:
      outs: (T, 1, O) per-step log-softmax outputs.
      hids: (T, 1, H) per-step hidden states (hids[-1] is the final hidden).
    """
    T = xs.shape[0]
    I = xs.shape[-1]
    H = h0.shape[1]
    O = kp["b_o2o"].shape[1]

    x2d = xs.reshape(T, I)

    # Category projections are constant across the sequence: hoist them out of
    # the kernel entirely (fewer kernel inputs, no init branch in the body).
    cat_h = category @ kp["wih_c"] + kp["b_i2h"]     # (1, H)
    cat_o = category @ kp["wio_c"] + kp["b_i2o"]     # (1, O)

    def const_spec(shape):
        return pl.BlockSpec(shape, lambda i: (0,) * len(shape))

    grid_spec = pltpu.PrefetchScalarGridSpec(
        num_scalar_prefetch=0,
        grid=(1,),   # single grid step; the time loop lives inside the kernel
        in_specs=[
            const_spec((1, H)),            # cat_h
            const_spec((1, O)),            # cat_o
            const_spec((1, H)),            # h0
            const_spec((T, I)),            # xs (full sequence, one DMA)
            const_spec((H, H)),            # wih_h
            const_spec((I, O)),            # wio_i
            const_spec((H, O)),            # wio_h
            const_spec((H, O)),            # woo_h
            const_spec((O, O)),            # woo_o
            const_spec((1, O)),            # b_o2o
        ],
        out_specs=[
            const_spec((T, O)),            # single bulk writeback of all outputs
            const_spec((T, H)),            # single bulk writeback of all hiddens
        ],
        scratch_shapes=[
            pltpu.VMEM((T, H), jnp.float32),   # previous-hidden rows
        ],
    )

    outs2d, hids2d = pl.pallas_call(
        _iii_rnn_seq_kernel,
        out_shape=(jax.ShapeDtypeStruct((T, O), jnp.float32),
                   jax.ShapeDtypeStruct((T, H), jnp.float32)),
        grid_spec=grid_spec,
        compiler_params=pltpu.CompilerParams(
            # NOTE: the recurrence carries state inside the kernel; the single
            # grid axis must stay "arbitrary" (never megacore-sharded).
            dimension_semantics=("arbitrary",)),
    )(cat_h, cat_o, h0, x2d,
      kp["wih_h"], kp["wio_i"], kp["wio_h"],
      kp["woo_h"], kp["woo_o"], kp["b_o2o"])

    return outs2d.reshape(T, 1, O), hids2d.reshape(T, 1, H)


iii_rnn_sequence = jax.jit(_iii_rnn_sequence)


def iii_rnn_step_ref(category, x, hidden, params):
    """Pure-JAX reference mirroring the PyTorch forward (dropout in eval mode)."""
    I = x.shape[1]
    iii_comb = jnp.concatenate(
        [category, jnp.zeros((1, I), jnp.float32), hidden], axis=1)
    comb = jnp.concatenate([category, x, hidden], axis=1)
    h_new = iii_comb @ params["w_i2h"] + params["b_i2h"]
    o1 = comb @ params["w_i2o"] + params["b_i2o"]
    o2 = jnp.concatenate([h_new, o1], axis=1) @ params["w_o2o"] + params["b_o2o"]
    return jax.nn.log_softmax(o2, axis=1), h_new


if __name__ == "__main__":
    key = jax.random.PRNGKey(0)
    kp_key, kc, kx = jax.random.split(key, 3)

    params = make_params(kp_key)
    kparams = split_params(params)

    T = 8
    cat_idx = int(jax.random.randint(kc, (), 0, N_CATEGORIES))
    category = jax.nn.one_hot(jnp.array([cat_idx]), N_CATEGORIES,
                              dtype=jnp.float32)
    xs = jax.random.normal(kx, (T, 1, INPUT_SIZE), jnp.float32)
    h0 = jnp.zeros((1, HIDDEN_SIZE), jnp.float32)

    outs, hids = jax.block_until_ready(
        iii_rnn_sequence(category, xs, h0, kparams))

    # Correctness check against pure-JAX per-step reference.
    h = h0
    for t in range(T):
        ref_out, h = iii_rnn_step_ref(category, xs[t], h, params)
        assert jnp.allclose(outs[t], ref_out, atol=2e-5), f"output mismatch @ t={t}"
        assert jnp.allclose(hids[t], h, atol=2e-5), f"hidden mismatch @ t={t}"

    print("KERNEL_OK")
</pallas_src>

<mosaic_0001>
module attributes {stable_mosaic.version = 11 : i64} {
  func.func @_iii_rnn_seq_kernel(%arg0: i32, %arg1: memref<1x32xf32, #tpu.memory_space<vmem>>, %arg2: memref<1x16xf32, #tpu.memory_space<vmem>>, %arg3: memref<1x32xf32, #tpu.memory_space<vmem>>, %arg4: memref<8x59xf32, #tpu.memory_space<vmem>>, %arg5: memref<32x32xf32, #tpu.memory_space<vmem>>, %arg6: memref<59x16xf32, #tpu.memory_space<vmem>>, %arg7: memref<32x16xf32, #tpu.memory_space<vmem>>, %arg8: memref<32x16xf32, #tpu.memory_space<vmem>>, %arg9: memref<16x16xf32, #tpu.memory_space<vmem>>, %arg10: memref<1x16xf32, #tpu.memory_space<vmem>>, %arg11: memref<8x16xf32, #tpu.memory_space<vmem>>, %arg12: memref<8x32xf32, #tpu.memory_space<vmem>>, %arg13: memref<8x32xf32, #tpu.memory_space<vmem>>) attributes {dimension_semantics = [#tpu.dimension_semantics<arbitrary>], iteration_bounds = array<i64: 1>, scalar_prefetch = 0 : i64, scratch_operands = 1 : i64, tpu.core_type = #tpu.core_type<tc>, window_params = [{pipeline_mode = #tpu.pipeline_mode<synchronous>, transform_indices = @transform_0, window_bounds = array<i64: 1, 32>}, {pipeline_mode = #tpu.pipeline_mode<synchronous>, transform_indices = @transform_1, window_bounds = array<i64: 1, 16>}, {pipeline_mode = #tpu.pipeline_mode<synchronous>, transform_indices = @transform_2, window_bounds = array<i64: 1, 32>}, {pipeline_mode = #tpu.pipeline_mode<synchronous>, transform_indices = @transform_3, window_bounds = array<i64: 8, 59>}, {pipeline_mode = #tpu.pipeline_mode<synchronous>, transform_indices = @transform_4, window_bounds = array<i64: 32, 32>}, {pipeline_mode = #tpu.pipeline_mode<synchronous>, transform_indices = @transform_5, window_bounds = array<i64: 59, 16>}, {pipeline_mode = #tpu.pipeline_mode<synchronous>, transform_indices = @transform_6, window_bounds = array<i64: 32, 16>}, {pipeline_mode = #tpu.pipeline_mode<synchronous>, transform_indices = @transform_7, window_bounds = array<i64: 32, 16>}, {pipeline_mode = #tpu.pipeline_mode<synchronous>, transform_indices = @transform_8, window_bounds = array<i64: 16, 16>}, {pipeline_mode = #tpu.pipeline_mode<synchronous>, transform_indices = @transform_9, window_bounds = array<i64: 1, 16>}, {pipeline_mode = #tpu.pipeline_mode<synchronous>, transform_indices = @transform_10, window_bounds = array<i64: 8, 16>}, {pipeline_mode = #tpu.pipeline_mode<synchronous>, transform_indices = @transform_11, window_bounds = array<i64: 8, 32>}]} {
    %c0 = arith.constant 0 : index
    %c0_0 = arith.constant 0 : index
    %0 = vector.load %arg1[%c0, %c0_0] : memref<1x32xf32, #tpu.memory_space<vmem>>, vector<1x32xf32>
    %c0_1 = arith.constant 0 : index
    %c0_2 = arith.constant 0 : index
    %1 = vector.load %arg5[%c0_1, %c0_2] : memref<32x32xf32, #tpu.memory_space<vmem>>, vector<32x32xf32>
    %c0_3 = arith.constant 0 : index
    %c0_4 = arith.constant 0 : index
    %2 = vector.load %arg3[%c0_3, %c0_4] : memref<1x32xf32, #tpu.memory_space<vmem>>, vector<1x32xf32>
    %c0_i32 = arith.constant 0 : i32
    %3 = arith.index_cast %c0_i32 : i32 to index
    %c0_5 = arith.constant 0 : index
    %4 = vector.load %arg13[%3, %c0_5] : memref<8x32xf32, #tpu.memory_space<vmem>>, vector<1x32xf32>
    tpu.vector_store %arg13[%3, %c0_5], %2 {strides = array<i32>} : memref<8x32xf32, #tpu.memory_space<vmem>>, vector<1x32xf32>,
    %cst = arith.constant dense<0.000000e+00> : vector<1x32xf32>
    %5 = tpu.matmul %2, %1, %cst {dimension_numbers = #tpu.dot_dimension_numbers<[1], [0], [0], [1], [0, 0, 1, 1], [], []>} : vector<1x32xf32>, vector<32x32xf32>, vector<1x32xf32> -> vector<1x32xf32>
    %6 = arith.addf %0, %5 : vector<1x32xf32>
    %7 = arith.index_cast %c0_i32 : i32 to index
    %c0_6 = arith.constant 0 : index
    %8 = vector.load %arg12[%7, %c0_6] : memref<8x32xf32, #tpu.memory_space<vmem>>, vector<1x32xf32>
    tpu.vector_store %arg12[%7, %c0_6], %6 {strides = array<i32>} : memref<8x32xf32, #tpu.memory_space<vmem>>, vector<1x32xf32>,
    %c1_i32 = arith.constant 1 : i32
    %9 = arith.index_cast %c1_i32 : i32 to index
    %c0_7 = arith.constant 0 : index
    %10 = vector.load %arg13[%9, %c0_7] : memref<8x32xf32, #tpu.memory_space<vmem>>, vector<1x32xf32>
    tpu.vector_store %arg13[%9, %c0_7], %6 {strides = array<i32>} : memref<8x32xf32, #tpu.memory_space<vmem>>, vector<1x32xf32>,
    %cst_8 = arith.constant dense<0.000000e+00> : vector<1x32xf32>
    %11 = tpu.matmul %6, %1, %cst_8 {dimension_numbers = #tpu.dot_dimension_numbers<[1], [0], [0], [1], [0, 0, 1, 1], [], []>} : vector<1x32xf32>, vector<32x32xf32>, vector<1x32xf32> -> vector<1x32xf32>
    %12 = arith.addf %0, %11 : vector<1x32xf32>
    %13 = arith.index_cast %c1_i32 : i32 to index
    %c0_9 = arith.constant 0 : index
    %14 = vector.load %arg12[%13, %c0_9] : memref<8x32xf32, #tpu.memory_space<vmem>>, vector<1x32xf32>
    tpu.vector_store %arg12[%13, %c0_9], %12 {strides = array<i32>} : memref<8x32xf32, #tpu.memory_space<vmem>>, vector<1x32xf32>,
    %c2_i32 = arith.constant 2 : i32
    %15 = arith.index_cast %c2_i32 : i32 to index
    %c0_10 = arith.constant 0 : index
    %16 = vector.load %arg13[%15, %c0_10] : memref<8x32xf32, #tpu.memory_space<vmem>>, vector<1x32xf32>
    tpu.vector_store %arg13[%15, %c0_10], %12 {strides = array<i32>} : memref<8x32xf32, #tpu.memory_space<vmem>>, vector<1x32xf32>,
    %cst_11 = arith.constant dense<0.000000e+00> : vector<1x32xf32>
    %17 = tpu.matmul %12, %1, %cst_11 {dimension_numbers = #tpu.dot_dimension_numbers<[1], [0], [0], [1], [0, 0, 1, 1], [], []>} : vector<1x32xf32>, vector<32x32xf32>, vector<1x32xf32> -> vector<1x32xf32>
    %18 = arith.addf %0, %17 : vector<1x32xf32>
    %19 = arith.index_cast %c2_i32 : i32 to index
    %c0_12 = arith.constant 0 : index
    %20 = vector.load %arg12[%19, %c0_12] : memref<8x32xf32, #tpu.memory_space<vmem>>, vector<1x32xf32>
    tpu.vector_store %arg12[%19, %c0_12], %18 {strides = array<i32>} : memref<8x32xf32, #tpu.memory_space<vmem>>, vector<1x32xf32>,
    %c3_i32 = arith.constant 3 : i32
    %21 = arith.index_cast %c3_i32 : i32 to index
    %c0_13 = arith.constant 0 : index
    %22 = vector.load %arg13[%21, %c0_13] : memref<8x32xf32, #tpu.memory_space<vmem>>, vector<1x32xf32>
    tpu.vector_store %arg13[%21, %c0_13], %18 {strides = array<i32>} : memref<8x32xf32, #tpu.memory_space<vmem>>, vector<1x32xf32>,
    %cst_14 = arith.constant dense<0.000000e+00> : vector<1x32xf32>
    %23 = tpu.matmul %18, %1, %cst_14 {dimension_numbers = #tpu.dot_dimension_numbers<[1], [0], [0], [1], [0, 0, 1, 1], [], []>} : vector<1x32xf32>, vector<32x32xf32>, vector<1x32xf32> -> vector<1x32xf32>
    %24 = arith.addf %0, %23 : vector<1x32xf32>
    %25 = arith.index_cast %c3_i32 : i32 to index
    %c0_15 = arith.constant 0 : index
    %26 = vector.load %arg12[%25, %c0_15] : memref<8x32xf32, #tpu.memory_space<vmem>>, vector<1x32xf32>
    tpu.vector_store %arg12[%25, %c0_15], %24 {strides = array<i32>} : memref<8x32xf32, #tpu.memory_space<vmem>>, vector<1x32xf32>,
    %c4_i32 = arith.constant 4 : i32
    %27 = arith.index_cast %c4_i32 : i32 to index
    %c0_16 = arith.constant 0 : index
    %28 = vector.load %arg13[%27, %c0_16] : memref<8x32xf32, #tpu.memory_space<vmem>>, vector<1x32xf32>
    tpu.vector_store %arg13[%27, %c0_16], %24 {strides = array<i32>} : memref<8x32xf32, #tpu.memory_space<vmem>>, vector<1x32xf32>,
    %cst_17 = arith.constant dense<0.000000e+00> : vector<1x32xf32>
    %29 = tpu.matmul %24, %1, %cst_17 {dimension_numbers = #tpu.dot_dimension_numbers<[1], [0], [0], [1], [0, 0, 1, 1], [], []>} : vector<1x32xf32>, vector<32x32xf32>, vector<1x32xf32> -> vector<1x32xf32>
    %30 = arith.addf %0, %29 : vector<1x32xf32>
    %31 = arith.index_cast %c4_i32 : i32 to index
    %c0_18 = arith.constant 0 : index
    %32 = vector.load %arg12[%31, %c0_18] : memref<8x32xf32, #tpu.memory_space<vmem>>, vector<1x32xf32>
    tpu.vector_store %arg12[%31, %c0_18], %30 {strides = array<i32>} : memref<8x32xf32, #tpu.memory_space<vmem>>, vector<1x32xf32>,
    %c5_i32 = arith.constant 5 : i32
    %33 = arith.index_cast %c5_i32 : i32 to index
    %c0_19 = arith.constant 0 : index
    %34 = vector.load %arg13[%33, %c0_19] : memref<8x32xf32, #tpu.memory_space<vmem>>, vector<1x32xf32>
    tpu.vector_store %arg13[%33, %c0_19], %30 {strides = array<i32>} : memref<8x32xf32, #tpu.memory_space<vmem>>, vector<1x32xf32>,
    %cst_20 = arith.constant dense<0.000000e+00> : vector<1x32xf32>
    %35 = tpu.matmul %30, %1, %cst_20 {dimension_numbers = #tpu.dot_dimension_numbers<[1], [0], [0], [1], [0, 0, 1, 1], [], []>} : vector<1x32xf32>, vector<32x32xf32>, vector<1x32xf32> -> vector<1x32xf32>
    %36 = arith.addf %0, %35 : vector<1x32xf32>
    %37 = arith.index_cast %c5_i32 : i32 to index
    %c0_21 = arith.constant 0 : index
    %38 = vector.load %arg12[%37, %c0_21] : memref<8x32xf32, #tpu.memory_space<vmem>>, vector<1x32xf32>
    tpu.vector_store %arg12[%37, %c0_21], %36 {strides = array<i32>} : memref<8x32xf32, #tpu.memory_space<vmem>>, vector<1x32xf32>,
    %c6_i32 = arith.constant 6 : i32
    %39 = arith.index_cast %c6_i32 : i32 to index
    %c0_22 = arith.constant 0 : index
    %40 = vector.load %arg13[%39, %c0_22] : memref<8x32xf32, #tpu.memory_space<vmem>>, vector<1x32xf32>
    tpu.vector_store %arg13[%39, %c0_22], %36 {strides = array<i32>} : memref<8x32xf32, #tpu.memory_space<vmem>>, vector<1x32xf32>,
    %cst_23 = arith.constant dense<0.000000e+00> : vector<1x32xf32>
    %41 = tpu.matmul %36, %1, %cst_23 {dimension_numbers = #tpu.dot_dimension_numbers<[1], [0], [0], [1], [0, 0, 1, 1], [], []>} : vector<1x32xf32>, vector<32x32xf32>, vector<1x32xf32> -> vector<1x32xf32>
    %42 = arith.addf %0, %41 : vector<1x32xf32>
    %43 = arith.index_cast %c6_i32 : i32 to index
    %c0_24 = arith.constant 0 : index
    %44 = vector.load %arg12[%43, %c0_24] : memref<8x32xf32, #tpu.memory_space<vmem>>, vector<1x32xf32>
    tpu.vector_store %arg12[%43, %c0_24], %42 {strides = array<i32>} : memref<8x32xf32, #tpu.memory_space<vmem>>, vector<1x32xf32>,
    %c7_i32 = arith.constant 7 : i32
    %45 = arith.index_cast %c7_i32 : i32 to index
    %c0_25 = arith.constant 0 : index
    %46 = vector.load %arg13[%45, %c0_25] : memref<8x32xf32, #tpu.memory_space<vmem>>, vector<1x32xf32>
    tpu.vector_store %arg13[%45, %c0_25], %42 {strides = array<i32>} : memref<8x32xf32, #tpu.memory_space<vmem>>, vector<1x32xf32>,
    %cst_26 = arith.constant dense<0.000000e+00> : vector<1x32xf32>
    %47 = tpu.matmul %42, %1, %cst_26 {dimension_numbers = #tpu.dot_dimension_numbers<[1], [0], [0], [1], [0, 0, 1, 1], [], []>} : vector<1x32xf32>, vector<32x32xf32>, vector<1x32xf32> -> vector<1x32xf32>
    %48 = arith.addf %0, %47 : vector<1x32xf32>
    %49 = arith.index_cast %c7_i32 : i32 to index
    %c0_27 = arith.constant 0 : index
    %50 = vector.load %arg12[%49, %c0_27] : memref<8x32xf32, #tpu.memory_space<vmem>>, vector<1x32xf32>
    tpu.vector_store %arg12[%49, %c0_27], %48 {strides = array<i32>} : memref<8x32xf32, #tpu.memory_space<vmem>>, vector<1x32xf32>,
    %c8_i32 = arith.constant 8 : i32
    %c0_28 = arith.constant 0 : index
    %c0_29 = arith.constant 0 : index
    %51 = vector.load %arg13[%c0_28, %c0_29] : memref<8x32xf32, #tpu.memory_space<vmem>>, vector<8x32xf32>
    %c0_30 = arith.constant 0 : index
    %c0_31 = arith.constant 0 : index
    %52 = vector.load %arg12[%c0_30, %c0_31] : memref<8x32xf32, #tpu.memory_space<vmem>>, vector<8x32xf32>
    %c0_32 = arith.constant 0 : index
    %c0_33 = arith.constant 0 : index
    %53 = vector.load %arg4[%c0_32, %c0_33] : memref<8x59xf32, #tpu.memory_space<vmem>>, vector<8x59xf32>
    %c0_34 = arith.constant 0 : index
    %c0_35 = arith.constant 0 : index
    %54 = vector.load %arg2[%c0_34, %c0_35] : memref<1x16xf32, #tpu.memory_space<vmem>>, vector<1x16xf32>
    %c0_36 = arith.constant 0 : index
    %c0_37 = arith.constant 0 : index
    %55 = vector.load %arg6[%c0_36, %c0_37] : memref<59x16xf32, #tpu.memory_space<vmem>>, vector<59x16xf32>
    %cst_38 = arith.constant dense<0.000000e+00> : vector<8x16xf32>
    %56 = tpu.matmul %53, %55, %cst_38 {dimension_numbers = #tpu.dot_dimension_numbers<[1], [0], [0], [1], [0, 0, 1, 1], [], []>} : vector<8x59xf32>, vector<59x16xf32>, vector<8x16xf32> -> vector<8x16xf32>
    %57 = vector.broadcast %54 : vector<1x16xf32> to vector<8x16xf32>
    %58 = arith.addf %57, %56 : vector<8x16xf32>
    %c0_39 = arith.constant 0 : index
    %c0_40 = arith.constant 0 : index
    %59 = vector.load %arg7[%c0_39, %c0_40] : memref<32x16xf32, #tpu.memory_space<vmem>>, vector<32x16xf32>
    %cst_41 = arith.constant dense<0.000000e+00> : vector<8x16xf32>
    %60 = tpu.matmul %51, %59, %cst_41 {dimension_numbers = #tpu.dot_dimension_numbers<[1], [0], [0], [1], [0, 0, 1, 1], [], []>} : vector<8x32xf32>, vector<32x16xf32>, vector<8x16xf32> -> vector<8x16xf32>
    %61 = arith.addf %58, %60 : vector<8x16xf32>
    %c0_42 = arith.constant 0 : index
    %c0_43 = arith.constant 0 : index
    %62 = vector.load %arg8[%c0_42, %c0_43] : memref<32x16xf32, #tpu.memory_space<vmem>>, vector<32x16xf32>
    %cst_44 = arith.constant dense<0.000000e+00> : vector<8x16xf32>
    %63 = tpu.matmul %52, %62, %cst_44 {dimension_numbers = #tpu.dot_dimension_numbers<[1], [0], [0], [1], [0, 0, 1, 1], [], []>} : vector<8x32xf32>, vector<32x16xf32>, vector<8x16xf32> -> vector<8x16xf32>
    %c0_45 = arith.constant 0 : index
    %c0_46 = arith.constant 0 : index
    %64 = vector.load %arg9[%c0_45, %c0_46] : memref<16x16xf32, #tpu.memory_space<vmem>>, vector<16x16xf32>
    %cst_47 = arith.constant dense<0.000000e+00> : vector<8x16xf32>
    %65 = tpu.matmul %61, %64, %cst_47 {dimension_numbers = #tpu.dot_dimension_numbers<[1], [0], [0], [1], [0, 0, 1, 1], [], []>} : vector<8x16xf32>, vector<16x16xf32>, vector<8x16xf32> -> vector<8x16xf32>
    %66 = arith.addf %63, %65 : vector<8x16xf32>
    %c0_48 = arith.constant 0 : index
    %c0_49 = arith.constant 0 : index
    %67 = vector.load %arg10[%c0_48, %c0_49] : memref<1x16xf32, #tpu.memory_space<vmem>>, vector<1x16xf32>
    %68 = vector.broadcast %67 : vector<1x16xf32> to vector<8x16xf32>
    %69 = arith.addf %66, %68 : vector<8x16xf32>
    %cst_50 = arith.constant dense<0xFF800000> : vector<8xf32>
    %70 = vector.multi_reduction <maximumf>, %69, %cst_50 [1] : vector<8x16xf32> to vector<8xf32>
    %71 = vector.shape_cast %70 : vector<8xf32> to vector<8x1xf32>
    %72 = vector.broadcast %71 : vector<8x1xf32> to vector<8x16xf32>
    %73 = arith.subf %69, %72 : vector<8x16xf32>
    %74 = math.exp %73 : vector<8x16xf32>
    %cst_51 = arith.constant dense<0.000000e+00> : vector<8xf32>
    %75 = vector.multi_reduction <add>, %74, %cst_51 [1] : vector<8x16xf32> to vector<8xf32>
    %76 = vector.shape_cast %75 : vector<8xf32> to vector<8x1xf32>
    %77 = math.log %76 : vector<8x1xf32>
    %78 = vector.broadcast %77 : vector<8x1xf32> to vector<8x16xf32>
    %79 = arith.subf %73, %78 : vector<8x16xf32>
    %c0_52 = arith.constant 0 : index
    %c0_53 = arith.constant 0 : index
    %80 = vector.load %arg11[%c0_52, %c0_53] : memref<8x16xf32, #tpu.memory_space<vmem>>, vector<8x16xf32>
    tpu.vector_store %arg11[%c0_52, %c0_53], %79 {strides = array<i32>} : memref<8x16xf32, #tpu.memory_space<vmem>>, vector<8x16xf32>,
    return
  }
  func.func @transform_0(%arg0: i32) -> (i32, i32) {
    %c0_i32 = arith.constant 0 : i32
    %c0_i32_0 = arith.constant 0 : i32
    %c0_i32_1 = arith.constant 0 : i32
    return %c0_i32, %c0_i32_0 : i32, i32
  }
  func.func @transform_1(%arg0: i32) -> (i32, i32) {
    %c0_i32 = arith.constant 0 : i32
    %c0_i32_0 = arith.constant 0 : i32
    %c0_i32_1 = arith.constant 0 : i32
    return %c0_i32, %c0_i32_0 : i32, i32
  }
  func.func @transform_2(%arg0: i32) -> (i32, i32) {
    %c0_i32 = arith.constant 0 : i32
    %c0_i32_0 = arith.constant 0 : i32
    %c0_i32_1 = arith.constant 0 : i32
    return %c0_i32, %c0_i32_0 : i32, i32
  }
  func.func @transform_3(%arg0: i32) -> (i32, i32) {
    %c0_i32 = arith.constant 0 : i32
    %c0_i32_0 = arith.constant 0 : i32
    %c0_i32_1 = arith.constant 0 : i32
    return %c0_i32, %c0_i32_0 : i32, i32
  }
  func.func @transform_4(%arg0: i32) -> (i32, i32) {
    %c0_i32 = arith.constant 0 : i32
    %c0_i32_0 = arith.constant 0 : i32
    %c0_i32_1 = arith.constant 0 : i32
    return %c0_i32, %c0_i32_0 : i32, i32
  }
  func.func @transform_5(%arg0: i32) -> (i32, i32) {
    %c0_i32 = arith.constant 0 : i32
    %c0_i32_0 = arith.constant 0 : i32
    %c0_i32_1 = arith.constant 0 : i32
    return %c0_i32, %c0_i32_0 : i32, i32
  }
  func.func @transform_6(%arg0: i32) -> (i32, i32) {
    %c0_i32 = arith.constant 0 : i32
    %c0_i32_0 = arith.constant 0 : i32
    %c0_i32_1 = arith.constant 0 : i32
    return %c0_i32, %c0_i32_0 : i32, i32
  }
  func.func @transform_7(%arg0: i32) -> (i32, i32) {
    %c0_i32 = arith.constant 0 : i32
    %c0_i32_0 = arith.constant 0 : i32
    %c0_i32_1 = arith.constant 0 : i32
    return %c0_i32, %c0_i32_0 : i32, i32
  }
  func.func @transform_8(%arg0: i32) -> (i32, i32) {
    %c0_i32 = arith.constant 0 : i32
    %c0_i32_0 = arith.constant 0 : i32
    %c0_i32_1 = arith.constant 0 : i32
    return %c0_i32, %c0_i32_0 : i32, i32
  }
  func.func @transform_9(%arg0: i32) -> (i32, i32) {
    %c0_i32 = arith.constant 0 : i32
    %c0_i32_0 = arith.constant 0 : i32
    %c0_i32_1 = arith.constant 0 : i32
    return %c0_i32, %c0_i32_0 : i32, i32
  }
  func.func @transform_10(%arg0: i32) -> (i32, i32) {
    %c0_i32 = arith.constant 0 : i32
    %c0_i32_0 = arith.constant 0 : i32
    %c0_i32_1 = arith.constant 0 : i32
    return %c0_i32, %c0_i32_0 : i32, i32
  }
  func.func @transform_11(%arg0: i32) -> (i32, i32) {
    %c0_i32 = arith.constant 0 : i32
    %c0_i32_0 = arith.constant 0 : i32
    %c0_i32_1 = arith.constant 0 : i32
    return %c0_i32, %c0_i32_0 : i32, i32
  }
}

</mosaic_0001>

<llo_original>
// kernel: _iii_rnn_sequence.1
$region0: #{_iii_rnn_sequence.1}
  #allocation0 [shape = 'u32[]', space=smem, size = 0x4, offset = 0x4, fixed_abs, tag = 'smem constant byte address 0x4 - core index']
  #allocation1 [shape = 'u32[144,128]{1,0:T(1,128)}', space=vmem, size = 0x12000, scoped, tag = 'internal scratch']
  #allocation2 [shape = 'f32[8,32]{1,0:T(8,128)}', space=vmem, size = 0x1000, scoped, tag = 'scratch operand']
  %s0 = inlined_call_operand.vmem [shape: f32[1,32], index: 0, kind: input, shape index: {}]
  %s1 = inlined_call_operand.vmem [shape: f32[1,16], index: 1, kind: input, shape index: {}]
  %s2 = inlined_call_operand.vmem [shape: f32[1,32], index: 2, kind: input, shape index: {}]
  %s3 = inlined_call_operand.vmem [shape: f32[8,59], index: 3, kind: input, shape index: {}]
  %s4 = inlined_call_operand.vmem [shape: f32[32,32], index: 4, kind: input, shape index: {}]
  %s5 = inlined_call_operand.vmem [shape: f32[59,16], index: 5, kind: input, shape index: {}]
  %s6 = inlined_call_operand.vmem [shape: f32[32,16], index: 6, kind: input, shape index: {}]
  %s7 = inlined_call_operand.vmem [shape: f32[32,16], index: 7, kind: input, shape index: {}]
  %s8 = inlined_call_operand.vmem [shape: f32[16,16], index: 8, kind: input, shape index: {}]
  %s9 = inlined_call_operand.vmem [shape: f32[1,16], index: 9, kind: input, shape index: {}]
  %s10 = inlined_call_operand.hbm [shape: f32[8,16], index: 10, kind: output, shape index: {0}]
  %s11 = inlined_call_operand.hbm [shape: f32[8,32], index: 11, kind: output, shape index: {1}]
  %12 = xla_tuple %s10, %s11
  %s13 = sld [smem:[#allocation0]]
  $region58: #{_iii_rnn_sequence.1} parent=0
    _
  %s15 = ssub.s32 1, %s13
  %s16 = scalar_select 0, %s15, %s13
  $region1: #{_iii_rnn_sequence.1} parent=0
    #allocation3 [shape = 'u8[4096]{0}', space=vmem, size = 0x1000, scoped, tag = 'output window, operand 0, single buffered']
    #allocation4 [shape = 's32[1]{0}', space=sflag, size = 0x4, scoped, tag = 'scoped memory for _iii_rnn_sequence.1']
    #allocation5 [shape = 'u8[4096]{0}', space=vmem, size = 0x1000, scoped, tag = 'output window, operand 1, single buffered']
    #allocation6 [shape = 's32[1]{0}', space=sflag, size = 0x4, scoped, tag = 'scoped memory for _iii_rnn_sequence.1']
    %17 = vsyncpa [#allocation4], 0
    %18 = vsyncpa [#allocation6], 0
    // Predicated region
    $region2: #{_iii_rnn_sequence.1} parent=1 // pred_check
      _
    $region3: #{_iii_rnn_sequence.1} parent=1 // pred_check_branch
      %20 = sbr.rel (0) target = $region5
    $region4: #{_iii_rnn_sequence.1} parent=1 // pred_region
      _
    $region5: #{_iii_rnn_sequence.1} parent=1 // pred_fallthru
      _
    // Predicated region
    $region6: #{_iii_rnn_sequence.1} parent=1 // pred_check
      _
    $region7: #{_iii_rnn_sequence.1} parent=1 // pred_check_branch
      %22 = sbr.rel (0) target = $region9
    $region8: #{_iii_rnn_sequence.1} parent=1 // pred_region
      _
    $region9: #{_iii_rnn_sequence.1} parent=1 // pred_fallthru
      _
    // Predicated region
    $region10: #{_iii_rnn_sequence.1} parent=1 // pred_check
      _
    $region11: #{_iii_rnn_sequence.1} parent=1 // pred_check_branch
      %24 = sbr.rel (0) target = $region13
    $region12: #{_iii_rnn_sequence.1} parent=1 // pred_region
      _
    $region13: #{_iii_rnn_sequence.1} parent=1 // pred_fallthru
      _
    // Predicated region
    $region14: #{_iii_rnn_sequence.1} parent=1 // pred_check
      _
    $region15: #{_iii_rnn_sequence.1} parent=1 // pred_check_branch
      %26 = sbr.rel (0) target = $region17
    $region16: #{_iii_rnn_sequence.1} parent=1 // pred_region
      _
    $region17: #{_iii_rnn_sequence.1} parent=1 // pred_fallthru
      _
    // Predicated region
    $region18: #{_iii_rnn_sequence.1} parent=1 // pred_check
      _
    $region19: #{_iii_rnn_sequence.1} parent=1 // pred_check_branch
      %28 = sbr.rel (0) target = $region21
    $region20: #{_iii_rnn_sequence.1} parent=1 // pred_region
      _
    $region21: #{_iii_rnn_sequence.1} parent=1 // pred_fallthru
      _
    // Predicated region
    $region22: #{_iii_rnn_sequence.1} parent=1 // pred_check
      _
    $region23: #{_iii_rnn_sequence.1} parent=1 // pred_check_branch
      %30 = sbr.rel (0) target = $region25
    $region24: #{_iii_rnn_sequence.1} parent=1 // pred_region
      _
    $region25: #{_iii_rnn_sequence.1} parent=1 // pred_fallthru
      _
    // Predicated region
    $region26: #{_iii_rnn_sequence.1} parent=1 // pred_check
      _
    $region27: #{_iii_rnn_sequence.1} parent=1 // pred_check_branch
      %32 = sbr.rel (0) target = $region29
    $region28: #{_iii_rnn_sequence.1} parent=1 // pred_region
      _
    $region29: #{_iii_rnn_sequence.1} parent=1 // pred_fallthru
      _
    // Predicated region
    $region30: #{_iii_rnn_sequence.1} parent=1 // pred_check
      _
    $region31: #{_iii_rnn_sequence.1} parent=1 // pred_check_branch
      %34 = sbr.rel (0) target = $region33
    $region32: #{_iii_rnn_sequence.1} parent=1 // pred_region
      _
    $region33: #{_iii_rnn_sequence.1} parent=1 // pred_fallthru
      _
    // Predicated region
    $region34: #{_iii_rnn_sequence.1} parent=1 // pred_check
      _
    $region35: #{_iii_rnn_sequence.1} parent=1 // pred_check_branch
      %36 = sbr.rel (0) target = $region37
    $region36: #{_iii_rnn_sequence.1} parent=1 // pred_region
      _
    $region37: #{_iii_rnn_sequence.1} parent=1 // pred_fallthru
      _
    // Predicated region
    $region38: #{_iii_rnn_sequence.1} parent=1 // pred_check
      _
    $region39: #{_iii_rnn_sequence.1} parent=1 // pred_check_branch
      %38 = sbr.rel (0) target = $region41
    $region40: #{_iii_rnn_sequence.1} parent=1 // pred_region
      _
    $region41: #{_iii_rnn_sequence.1} parent=1 // pred_fallthru
      _
    %v39 = vld [vmem:[%s0] sm:$0x1]
    %v40 = vld [vmem:[%s4] sm:$0xff]
    %v41 = vld [vmem:[%s4 + $0x8] sm:$0xff]
    %v42 = vld [vmem:[%s4 + $0x10] sm:$0xff]
    %v43 = vld [vmem:[%s4 + $0x18] sm:$0xff]
    %v44 = vld [vmem:[%s2] sm:$0x1]
    %vm45 = vcmask 253952
    %46 = vst.msk [vmem:[#allocation2] sm:$0x1] %vm45, %v44
    %vm47 = vcmask 261120
    %v49 = vsel %vm47, %v44, 0
    %51 = vmatprep.subr.mxu0 0.0
    %52 = vmatpush1.msra.mxu0 0.0
    %53 = vmatprep.subr.mxu0 0.0
    %54 = vmatpush1.msra.mxu0 0.0
    %55 = vmatprep.subr.mxu0 0.0
    %56 = vmatpush1.msra.mxu0 0.0
    %57 = vmatprep.subr.mxu0 0.0
    %58 = vmatpush1.msra.mxu0 0.0
    %59 = vmatprep.subr.mxu0 0.0
    %60 = vmatpush1.msra.mxu0 0.0
    %61 = vmatprep.subr.mxu0 0.0
    %62 = vmatpush1.msra.mxu0 0.0
    %63 = vmatprep.subr.mxu0 0.0
    %64 = vmatpush1.msra.mxu0 0.0
    %65 = vmatprep.subr.mxu0 0.0
    %66 = vmatpush1.msra.mxu0 0.0
    %67 = vmatprep.subr.mxu0 0.0
    %68 = vmatpush1.msra.mxu0 0.0
    %69 = vmatprep.subr.mxu0 0.0
    %70 = vmatpush1.msra.mxu0 0.0
    %71 = vmatprep.subr.mxu0 0.0
    %72 = vmatpush1.msra.mxu0 0.0
    %73 = vmatprep.subr.mxu0 0.0
    %74 = vmatpush1.msra.mxu0 0.0
    %75 = vmatprep.subr.mxu0 0.0
    %76 = vmatpush1.msra.mxu0 %v43
    %77 = vmatprep.subr.mxu0 0.0
    %78 = vmatpush1.msra.mxu0 %v42
    %79 = vmatprep.subr.mxu0 0.0
    %80 = vmatpush1.msra.mxu0 %v41
    %81 = vmatprep.subr.mxu0 0.0
    %82 = vmatpush1.msra.mxu0 %v40
    %83 = vmatprep.subr.mxu0 0.0
    %84 = vmatpush2.msra.mxu0 0.0
    %85 = vmatprep.subr.mxu0 0.0
    %86 = vmatpush2.msra.mxu0 0.0
    %87 = vmatprep.subr.mxu0 0.0
    %88 = vmatpush2.msra.mxu0 0.0
    %89 = vmatprep.subr.mxu0 0.0
    %90 = vmatpush2.msra.mxu0 0.0
    %91 = vmatprep.subr.mxu0 0.0
    %92 = vmatpush2.msra.mxu0 0.0
    %93 = vmatprep.subr.mxu0 0.0
    %94 = vmatpush2.msra.mxu0 0.0
    %95 = vmatprep.subr.mxu0 0.0
    %96 = vmatpush2.msra.mxu0 0.0
    %97 = vmatprep.subr.mxu0 0.0
    %98 = vmatpush2.msra.mxu0 0.0
    %99 = vmatprep.subr.mxu0 0.0
    %100 = vmatpush2.msra.mxu0 0.0
    %101 = vmatprep.subr.mxu0 0.0
    %102 = vmatpush2.msra.mxu0 0.0
    %103 = vmatprep.subr.mxu0 0.0
    %104 = vmatpush2.msra.mxu0 0.0
    %105 = vmatprep.subr.mxu0 0.0
    %106 = vmatpush2.msra.mxu0 0.0
    %107 = vmatprep.subr.mxu0 0.0
    %108 = vmatpush2.msra.mxu0 0.0
    %109 = vmatprep.subr.mxu0 0.0
    %110 = vmatpush2.msra.mxu0 0.0
    %111 = vmatprep.subr.mxu0 0.0
    %112 = vmatpush2.msra.mxu0 0.0
    %113 = vmatprep.subr.mxu0 0.0
    %114 = vmatpush2.msra.mxu0 0.0
    %115 = vmatprep.mubr.f32.mxu0 0.0
    %116 = vmatmul.mubr.f32.gmra.mxu0 %v49
    %v117 = vpop.f32.mrf.mxu0
    %v118 = vadd.f32 0.0, %v117
    %v119 = vpop.f32.mrf.mxu0
    %120 = vdwg.mxu0
    %v121 = vadd.f32 %v39, %v118
    %122 = vst.msk [vmem:[#allocation5] sm:$0x1] %vm45, %v121
    %123 = vst.msk [vmem:[#allocation2 + $0x1] sm:$0x1] %vm45, %v121
    %v125 = vsel %vm47, %v121, 0
    %127 = vmatprep.subr.mxu0 0.0
    %128 = vmatpush1.msra.mxu0 0.0
    %129 = vmatprep.subr.mxu0 0.0
    %130 = vmatpush1.msra.mxu0 0.0
    %131 = vmatprep.subr.mxu0 0.0
    %132 = vmatpush1.msra.mxu0 0.0
    %133 = vmatprep.subr.mxu0 0.0
    %134 = vmatpush1.msra.mxu0 0.0
    %135 = vmatprep.subr.mxu0 0.0
    %136 = vmatpush1.msra.mxu0 0.0
    %137 = vmatprep.subr.mxu0 0.0
    %138 = vmatpush1.msra.mxu0 0.0
    %139 = vmatprep.subr.mxu0 0.0
    %140 = vmatpush1.msra.mxu0 0.0
    %141 = vmatprep.subr.mxu0 0.0
    %142 = vmatpush1.msra.mxu0 0.0
    %143 = vmatprep.subr.mxu0 0.0
    %144 = vmatpush1.msra.mxu0 0.0
    %145 = vmatprep.subr.mxu0 0.0
    %146 = vmatpush1.msra.mxu0 0.0
    %147 = vmatprep.subr.mxu0 0.0
    %148 = vmatpush1.msra.mxu0 0.0
    %149 = vmatprep.subr.mxu0 0.0
    %150 = vmatpush1.msra.mxu0 0.0
    %151 = vmatprep.subr.mxu0 0.0
    %152 = vmatpush1.msra.mxu0 %v43
    %153 = vmatprep.subr.mxu0 0.0
    %154 = vmatpush1.msra.mxu0 %v42
    %155 = vmatprep.subr.mxu0 0.0
    %156 = vmatpush1.msra.mxu0 %v41
    %157 = vmatprep.subr.mxu0 0.0
    %158 = vmatpush1.msra.mxu0 %v40
    %159 = vmatprep.subr.mxu0 0.0
    %160 = vmatpush2.msra.mxu0 0.0
    %161 = vmatprep.subr.mxu0 0.0
    %162 = vmatpush2.msra.mxu0 0.0
    %163 = vmatprep.subr.mxu0 0.0
    %164 = vmatpush2.msra.mxu0 0.0
    %165 = vmatprep.subr.mxu0 0.0
    %166 = vmatpush2.msra.mxu0 0.0
    %167 = vmatprep.subr.mxu0 0.0
    %168 = vmatpush2.msra.mxu0 0.0
    %169 = vmatprep.subr.mxu0 0.0
    %170 = vmatpush2.msra.mxu0 0.0
    %171 = vmatprep.subr.mxu0 0.0
    %172 = vmatpush2.msra.mxu0 0.0
    %173 = vmatprep.subr.mxu0 0.0
    %174 = vmatpush2.msra.mxu0 0.0
    %175 = vmatprep.subr.mxu0 0.0
    %176 = vmatpush2.msra.mxu0 0.0
    %177 = vmatprep.subr.mxu0 0.0
    %178 = vmatpush2.msra.mxu0 0.0
    %179 = vmatprep.subr.mxu0 0.0
    %180 = vmatpush2.msra.mxu0 0.0
    %181 = vmatprep.subr.mxu0 0.0
    %182 = vmatpush2.msra.mxu0 0.0
    %183 = vmatprep.subr.mxu0 0.0
    %184 = vmatpush2.msra.mxu0 0.0
    %185 = vmatprep.subr.mxu0 0.0
    %186 = vmatpush2.msra.mxu0 0.0
    %187 = vmatprep.subr.mxu0 0.0
    %188 = vmatpush2.msra.mxu0 0.0
    %189 = vmatprep.subr.mxu0 0.0
    %190 = vmatpush2.msra.mxu0 0.0
    %191 = vmatprep.mubr.f32.mxu0 0.0
    %192 = vmatmul.mubr.f32.gmra.mxu0 %v125
    %v193 = vpop.f32.mrf.mxu0
    %v194 = vadd.f32 0.0, %v193
    %v195 = vpop.f32.mrf.mxu0
    %196 = vdwg.mxu0
    %v197 = vadd.f32 %v39, %v194
    %198 = vst.msk [vmem:[#allocation5 + $0x1] sm:$0x1] %vm45, %v197
    %199 = vst.msk [vmem:[#allocation2 + $0x2] sm:$0x1] %vm45, %v197
    %v201 = vsel %vm47, %v197, 0
    %203 = vmatprep.subr.mxu0 0.0
    %204 = vmatpush1.msra.mxu0 0.0
    %205 = vmatprep.subr.mxu0 0.0
    %206 = vmatpush1.msra.mxu0 0.0
    %207 = vmatprep.subr.mxu0 0.0
    %208 = vmatpush1.msra.mxu0 0.0
    %209 = vmatprep.subr.mxu0 0.0
    %210 = vmatpush1.msra.mxu0 0.0
    %211 = vmatprep.subr.mxu0 0.0
    %212 = vmatpush1.msra.mxu0 0.0
    %213 = vmatprep.subr.mxu0 0.0
    %214 = vmatpush1.msra.mxu0 0.0
    %215 = vmatprep.subr.mxu0 0.0
    %216 = vmatpush1.msra.mxu0 0.0
    %217 = vmatprep.subr.mxu0 0.0
    %218 = vmatpush1.msra.mxu0 0.0
    %219 = vmatprep.subr.mxu0 0.0
    %220 = vmatpush1.msra.mxu0 0.0
    %221 = vmatprep.subr.mxu0 0.0
    %222 = vmatpush1.msra.mxu0 0.0
    %223 = vmatprep.subr.mxu0 0.0
    %224 = vmatpush1.msra.mxu0 0.0
    %225 = vmatprep.subr.mxu0 0.0
    %226 = vmatpush1.msra.mxu0 0.0
    %227 = vmatprep.subr.mxu0 0.0
    %228 = vmatpush1.msra.mxu0 %v43
    %229 = vmatprep.subr.mxu0 0.0
    %230 = vmatpush1.msra.mxu0 %v42
    %231 = vmatprep.subr.mxu0 0.0
    %232 = vmatpush1.msra.mxu0 %v41
    %233 = vmatprep.subr.mxu0 0.0
    %234 = vmatpush1.msra.mxu0 %v40
    %235 = vmatprep.subr.mxu0 0.0
    %236 = vmatpush2.msra.mxu0 0.0
    %237 = vmatprep.subr.mxu0 0.0
    %238 = vmatpush2.msra.mxu0 0.0
    %239 = vmatprep.subr.mxu0 0.0
    %240 = vmatpush2.msra.mxu0 0.0
    %241 = vmatprep.subr.mxu0 0.0
    %242 = vmatpush2.msra.mxu0 0.0
    %243 = vmatprep.subr.mxu0 0.0
    %244 = vmatpush2.msra.mxu0 0.0
    %245 = vmatprep.subr.mxu0 0.0
    %246 = vmatpush2.msra.mxu0 0.0
    %247 = vmatprep.subr.mxu0 0.0
    %248 = vmatpush2.msra.mxu0 0.0
    %249 = vmatprep.subr.mxu0 0.0
    %250 = vmatpush2.msra.mxu0 0.0
    %251 = vmatprep.subr.mxu0 0.0
    %252 = vmatpush2.msra.mxu0 0.0
    %253 = vmatprep.subr.mxu0 0.0
    %254 = vmatpush2.msra.mxu0 0.0
    %255 = vmatprep.subr.mxu0 0.0
    %256 = vmatpush2.msra.mxu0 0.0
    %257 = vmatprep.subr.mxu0 0.0
    %258 = vmatpush2.msra.mxu0 0.0
    %259 = vmatprep.subr.mxu0 0.0
    %260 = vmatpush2.msra.mxu0 0.0
    %261 = vmatprep.subr.mxu0 0.0
    %262 = vmatpush2.msra.mxu0 0.0
    %263 = vmatprep.subr.mxu0 0.0
    %264 = vmatpush2.msra.mxu0 0.0
    %265 = vmatprep.subr.mxu0 0.0
    %266 = vmatpush2.msra.mxu0 0.0
    %267 = vmatprep.mubr.f32.mxu0 0.0
    %268 = vmatmul.mubr.f32.gmra.mxu0 %v201
    %v269 = vpop.f32.mrf.mxu0
    %v270 = vadd.f32 0.0, %v269
    %v271 = vpop.f32.mrf.mxu0
    %272 = vdwg.mxu0
    %v273 = vadd.f32 %v39, %v270
    %274 = vst.msk [vmem:[#allocation5 + $0x2] sm:$0x1] %vm45, %v273
    %275 = vst.msk [vmem:[#allocation2 + $0x3] sm:$0x1] %vm45, %v273
    %v277 = vsel %vm47, %v273, 0
    %279 = vmatprep.subr.mxu0 0.0
    %280 = vmatpush1.msra.mxu0 0.0
    %281 = vmatprep.subr.mxu0 0.0
    %282 = vmatpush1.msra.mxu0 0.0
    %283 = vmatprep.subr.mxu0 0.0
    %284 = vmatpush1.msra.mxu0 0.0
    %285 = vmatprep.subr.mxu0 0.0
    %286 = vmatpush1.msra.mxu0 0.0
    %287 = vmatprep.subr.mxu0 0.0
    %288 = vmatpush1.msra.mxu0 0.0
    %289 = vmatprep.subr.mxu0 0.0
    %290 = vmatpush1.msra.mxu0 0.0
    %291 = vmatprep.subr.mxu0 0.0
    %292 = vmatpush1.msra.mxu0 0.0
    %293 = vmatprep.subr.mxu0 0.0
    %294 = vmatpush1.msra.mxu0 0.0
    %295 = vmatprep.subr.mxu0 0.0
    %296 = vmatpush1.msra.mxu0 0.0
    %297 = vmatprep.subr.mxu0 0.0
    %298 = vmatpush1.msra.mxu0 0.0
    %299 = vmatprep.subr.mxu0 0.0
    %300 = vmatpush1.msra.mxu0 0.0
    %301 = vmatprep.subr.mxu0 0.0
    %302 = vmatpush1.msra.mxu0 0.0
    %303 = vmatprep.subr.mxu0 0.0
    %304 = vmatpush1.msra.mxu0 %v43
    %305 = vmatprep.subr.mxu0 0.0
    %306 = vmatpush1.msra.mxu0 %v42
    %307 = vmatprep.subr.mxu0 0.0
    %308 = vmatpush1.msra.mxu0 %v41
    %309 = vmatprep.subr.mxu0 0.0
    %310 = vmatpush1.msra.mxu0 %v40
    %311 = vmatprep.subr.mxu0 0.0
    %312 = vmatpush2.msra.mxu0 0.0
    %313 = vmatprep.subr.mxu0 0.0
    %314 = vmatpush2.msra.mxu0 0.0
    %315 = vmatprep.subr.mxu0 0.0
    %316 = vmatpush2.msra.mxu0 0.0
    %317 = vmatprep.subr.mxu0 0.0
    %318 = vmatpush2.msra.mxu0 0.0
    %319 = vmatprep.subr.mxu0 0.0
    %320 = vmatpush2.msra.mxu0 0.0
    %321 = vmatprep.subr.mxu0 0.0
    %322 = vmatpush2.msra.mxu0 0.0
    %323 = vmatprep.subr.mxu0 0.0
    %324 = vmatpush2.msra.mxu0 0.0
    %325 = vmatprep.subr.mxu0 0.0
    %326 = vmatpush2.msra.mxu0 0.0
    %327 = vmatprep.subr.mxu0 0.0
    %328 = vmatpush2.msra.mxu0 0.0
    %329 = vmatprep.subr.mxu0 0.0
    %330 = vmatpush2.msra.mxu0 0.0
    %331 = vmatprep.subr.mxu0 0.0
    %332 = vmatpush2.msra.mxu0 0.0
    %333 = vmatprep.subr.mxu0 0.0
    %334 = vmatpush2.msra.mxu0 0.0
    %335 = vmatprep.subr.mxu0 0.0
    %336 = vmatpush2.msra.mxu0 0.0
    %337 = vmatprep.subr.mxu0 0.0
    %338 = vmatpush2.msra.mxu0 0.0
    %339 = vmatprep.subr.mxu0 0.0
    %340 = vmatpush2.msra.mxu0 0.0
    %341 = vmatprep.subr.mxu0 0.0
    %342 = vmatpush2.msra.mxu0 0.0
    %343 = vmatprep.mubr.f32.mxu0 0.0
    %344 = vmatmul.mubr.f32.gmra.mxu0 %v277
    %v345 = vpop.f32.mrf.mxu0
    %v346 = vadd.f32 0.0, %v345
    %v347 = vpop.f32.mrf.mxu0
    %348 = vdwg.mxu0
    %v349 = vadd.f32 %v39, %v346
    %350 = vst.msk [vmem:[#allocation5 + $0x3] sm:$0x1] %vm45, %v349
    %351 = vst.msk [vmem:[#allocation2 + $0x4] sm:$0x1] %vm45, %v349
    %v353 = vsel %vm47, %v349, 0
    %355 = vmatprep.subr.mxu0 0.0
    %356 = vmatpush1.msra.mxu0 0.0
    %357 = vmatprep.subr.mxu0 0.0
    %358 = vmatpush1.msra.mxu0 0.0
    %359 = vmatprep.subr.mxu0 0.0
    %360 = vmatpush1.msra.mxu0 0.0
    %361 = vmatprep.subr.mxu0 0.0
    %362 = vmatpush1.msra.mxu0 0.0
    %363 = vmatprep.subr.mxu0 0.0
    %364 = vmatpush1.msra.mxu0 0.0
    %365 = vmatprep.subr.mxu0 0.0
    %366 = vmatpush1.msra.mxu0 0.0
    %367 = vmatprep.subr.mxu0 0.0
    %368 = vmatpush1.msra.mxu0 0.0
    %369 = vmatprep.subr.mxu0 0.0
    %370 = vmatpush1.msra.mxu0 0.0
    %371 = vmatprep.subr.mxu0 0.0
    %372 = vmatpush1.msra.mxu0 0.0
    %373 = vmatprep.subr.mxu0 0.0
    %374 = vmatpush1.msra.mxu0 0.0
    %375 = vmatprep.subr.mxu0 0.0
    %376 = vmatpush1.msra.mxu0 0.0
    %377 = vmatprep.subr.mxu0 0.0
    %378 = vmatpush1.msra.mxu0 0.0
    %379 = vmatprep.subr.mxu0 0.0
    %380 = vmatpush1.msra.mxu0 %v43
    %381 = vmatprep.subr.mxu0 0.0
    %382 = vmatpush1.msra.mxu0 %v42
    %383 = vmatprep.subr.mxu0 0.0
    %384 = vmatpush1.msra.mxu0 %v41
    %385 = vmatprep.subr.mxu0 0.0
    %386 = vmatpush1.msra.mxu0 %v40
    %387 = vmatprep.subr.mxu0 0.0
    %388 = vmatpush2.msra.mxu0 0.0
    %389 = vmatprep.subr.mxu0 0.0
    %390 = vmatpush2.msra.mxu0 0.0
    %391 = vmatprep.subr.mxu0 0.0
    %392 = vmatpush2.msra.mxu0 0.0
    %393 = vmatprep.subr.mxu0 0.0
    %394 = vmatpush2.msra.mxu0 0.0
    %395 = vmatprep.subr.mxu0 0.0
    %396 = vmatpush2.msra.mxu0 0.0
    %397 = vmatprep.subr.mxu0 0.0
    %398 = vmatpush2.msra.mxu0 0.0
    %399 = vmatprep.subr.mxu0 0.0
    %400 = vmatpush2.msra.mxu0 0.0
    %401 = vmatprep.subr.mxu0 0.0
    %402 = vmatpush2.msra.mxu0 0.0
    %403 = vmatprep.subr.mxu0 0.0
    %404 = vmatpush2.msra.mxu0 0.0
    %405 = vmatprep.subr.mxu0 0.0
    %406 = vmatpush2.msra.mxu0 0.0
    %407 = vmatprep.subr.mxu0 0.0
    %408 = vmatpush2.msra.mxu0 0.0
    %409 = vmatprep.subr.mxu0 0.0
    %410 = vmatpush2.msra.mxu0 0.0
    %411 = vmatprep.subr.mxu0 0.0
    %412 = vmatpush2.msra.mxu0 0.0
    %413 = vmatprep.subr.mxu0 0.0
    %414 = vmatpush2.msra.mxu0 0.0
    %415 = vmatprep.subr.mxu0 0.0
    %416 = vmatpush2.msra.mxu0 0.0
    %417 = vmatprep.subr.mxu0 0.0
    %418 = vmatpush2.msra.mxu0 0.0
    %419 = vmatprep.mubr.f32.mxu0 0.0
    %420 = vmatmul.mubr.f32.gmra.mxu0 %v353
    %v421 = vpop.f32.mrf.mxu0
    %v422 = vadd.f32 0.0, %v421
    %v423 = vpop.f32.mrf.mxu0
    %424 = vdwg.mxu0
    %v425 = vadd.f32 %v39, %v422
    %426 = vst.msk [vmem:[#allocation5 + $0x4] sm:$0x1] %vm45, %v425
    %427 = vst.msk [vmem:[#allocation2 + $0x5] sm:$0x1] %vm45, %v425
    %v429 = vsel %vm47, %v425, 0
    %431 = vmatprep.subr.mxu0 0.0
    %432 = vmatpush1.msra.mxu0 0.0
    %433 = vmatprep.subr.mxu0 0.0
    %434 = vmatpush1.msra.mxu0 0.0
    %435 = vmatprep.subr.mxu0 0.0
    %436 = vmatpush1.msra.mxu0 0.0
    %437 = vmatprep.subr.mxu0 0.0
    %438 = vmatpush1.msra.mxu0 0.0
    %439 = vmatprep.subr.mxu0 0.0
    %440 = vmatpush1.msra.mxu0 0.0
    %441 = vmatprep.subr.mxu0 0.0
    %442 = vmatpush1.msra.mxu0 0.0
    %443 = vmatprep.subr.mxu0 0.0
    %444 = vmatpush1.msra.mxu0 0.0
    %445 = vmatprep.subr.mxu0 0.0
    %446 = vmatpush1.msra.mxu0 0.0
    %447 = vmatprep.subr.mxu0 0.0
    %448 = vmatpush1.msra.mxu0 0.0
    %449 = vmatprep.subr.mxu0 0.0
    %450 = vmatpush1.msra.mxu0 0.0
    %451 = vmatprep.subr.mxu0 0.0
    %452 = vmatpush1.msra.mxu0 0.0
    %453 = vmatprep.subr.mxu0 0.0
    %454 = vmatpush1.msra.mxu0 0.0
    %455 = vmatprep.subr.mxu0 0.0
    %456 = vmatpush1.msra.mxu0 %v43
    %457 = vmatprep.subr.mxu0 0.0
    %458 = vmatpush1.msra.mxu0 %v42
    %459 = vmatprep.subr.mxu0 0.0
    %460 = vmatpush1.msra.mxu0 %v41
    %461 = vmatprep.subr.mxu0 0.0
    %462 = vmatpush1.msra.mxu0 %v40
    %463 = vmatprep.subr.mxu0 0.0
    %464 = vmatpush2.msra.mxu0 0.0
    %465 = vmatprep.subr.mxu0 0.0
    %466 = vmatpush2.msra.mxu0 0.0
    %467 = vmatprep.subr.mxu0 0.0
    %468 = vmatpush2.msra.mxu0 0.0
    %469 = vmatprep.subr.mxu0 0.0
    %470 = vmatpush2.msra.mxu0 0.0
    %471 = vmatprep.subr.mxu0 0.0
    %472 = vmatpush2.msra.mxu0 0.0
    %473 = vmatprep.subr.mxu0 0.0
    %474 = vmatpush2.msra.mxu0 0.0
    %475 = vmatprep.subr.mxu0 0.0
    %476 = vmatpush2.msra.mxu0 0.0
    %477 = vmatprep.subr.mxu0 0.0
    %478 = vmatpush2.msra.mxu0 0.0
    %479 = vmatprep.subr.mxu0 0.0
    %480 = vmatpush2.msra.mxu0 0.0
    %481 = vmatprep.subr.mxu0 0.0
    %482 = vmatpush2.msra.mxu0 0.0
    %483 = vmatprep.subr.mxu0 0.0
    %484 = vmatpush2.msra.mxu0 0.0
    %485 = vmatprep.subr.mxu0 0.0
    %486 = vmatpush2.msra.mxu0 0.0
    %487 = vmatprep.subr.mxu0 0.0
    %488 = vmatpush2.msra.mxu0 0.0
    %489 = vmatprep.subr.mxu0 0.0
    %490 = vmatpush2.msra.mxu0 0.0
    %491 = vmatprep.subr.mxu0 0.0
    %492 = vmatpush2.msra.mxu0 0.0
    %493 = vmatprep.subr.mxu0 0.0
    %494 = vmatpush2.msra.mxu0 0.0
    %495 = vmatprep.mubr.f32.mxu0 0.0
    %496 = vmatmul.mubr.f32.gmra.mxu0 %v429
    %v497 = vpop.f32.mrf.mxu0
    %v498 = vadd.f32 0.0, %v497
    %v499 = vpop.f32.mrf.mxu0
    %500 = vdwg.mxu0
    %v501 = vadd.f32 %v39, %v498
    %502 = vst.msk [vmem:[#allocation5 + $0x5] sm:$0x1] %vm45, %v501
    %503 = vst.msk [vmem:[#allocation2 + $0x6] sm:$0x1] %vm45, %v501
    %v505 = vsel %vm47, %v501, 0
    %507 = vmatprep.subr.mxu0 0.0
    %508 = vmatpush1.msra.mxu0 0.0
    %509 = vmatprep.subr.mxu0 0.0
    %510 = vmatpush1.msra.mxu0 0.0
    %511 = vmatprep.subr.mxu0 0.0
    %512 = vmatpush1.msra.mxu0 0.0
    %513 = vmatprep.subr.mxu0 0.0
    %514 = vmatpush1.msra.mxu0 0.0
    %515 = vmatprep.subr.mxu0 0.0
    %516 = vmatpush1.msra.mxu0 0.0
    %517 = vmatprep.subr.mxu0 0.0
    %518 = vmatpush1.msra.mxu0 0.0
    %519 = vmatprep.subr.mxu0 0.0
    %520 = vmatpush1.msra.mxu0 0.0
    %521 = vmatprep.subr.mxu0 0.0
    %522 = vmatpush1.msra.mxu0 0.0
    %523 = vmatprep.subr.mxu0 0.0
    %524 = vmatpush1.msra.mxu0 0.0
    %525 = vmatprep.subr.mxu0 0.0
    %526 = vmatpush1.msra.mxu0 0.0
    %527 = vmatprep.subr.mxu0 0.0
    %528 = vmatpush1.msra.mxu0 0.0
    %529 = vmatprep.subr.mxu0 0.0
    %530 = vmatpush1.msra.mxu0 0.0
    %531 = vmatprep.subr.mxu0 0.0
    %532 = vmatpush1.msra.mxu0 %v43
    %533 = vmatprep.subr.mxu0 0.0
    %534 = vmatpush1.msra.mxu0 %v42
    %535 = vmatprep.subr.mxu0 0.0
    %536 = vmatpush1.msra.mxu0 %v41
    %537 = vmatprep.subr.mxu0 0.0
    %538 = vmatpush1.msra.mxu0 %v40
    %539 = vmatprep.subr.mxu0 0.0
    %540 = vmatpush2.msra.mxu0 0.0
    %541 = vmatprep.subr.mxu0 0.0
    %542 = vmatpush2.msra.mxu0 0.0
    %543 = vmatprep.subr.mxu0 0.0
    %544 = vmatpush2.msra.mxu0 0.0
    %545 = vmatprep.subr.mxu0 0.0
    %546 = vmatpush2.msra.mxu0 0.0
    %547 = vmatprep.subr.mxu0 0.0
    %548 = vmatpush2.msra.mxu0 0.0
    %549 = vmatprep.subr.mxu0 0.0
    %550 = vmatpush2.msra.mxu0 0.0
    %551 = vmatprep.subr.mxu0 0.0
    %552 = vmatpush2.msra.mxu0 0.0
    %553 = vmatprep.subr.mxu0 0.0
    %554 = vmatpush2.msra.mxu0 0.0
    %555 = vmatprep.subr.mxu0 0.0
    %556 = vmatpush2.msra.mxu0 0.0
    %557 = vmatprep.subr.mxu0 0.0
    %558 = vmatpush2.msra.mxu0 0.0
    %559 = vmatprep.subr.mxu0 0.0
    %560 = vmatpush2.msra.mxu0 0.0
    %561 = vmatprep.subr.mxu0 0.0
    %562 = vmatpush2.msra.mxu0 0.0
    %563 = vmatprep.subr.mxu0 0.0
    %564 = vmatpush2.msra.mxu0 0.0
    %565 = vmatprep.subr.mxu0 0.0
    %566 = vmatpush2.msra.mxu0 0.0
    %567 = vmatprep.subr.mxu0 0.0
    %568 = vmatpush2.msra.mxu0 0.0
    %569 = vmatprep.subr.mxu0 0.0
    %570 = vmatpush2.msra.mxu0 0.0
    %571 = vmatprep.mubr.f32.mxu0 0.0
    %572 = vmatmul.mubr.f32.gmra.mxu0 %v505
    %v573 = vpop.f32.mrf.mxu0
    %v574 = vadd.f32 0.0, %v573
    %v575 = vpop.f32.mrf.mxu0
    %576 = vdwg.mxu0
    %v577 = vadd.f32 %v39, %v574
    %578 = vst.msk [vmem:[#allocation5 + $0x6] sm:$0x1] %vm45, %v577
    %579 = vst.msk [vmem:[#allocation2 + $0x7] sm:$0x1] %vm45, %v577
    %v581 = vsel %vm47, %v577, 0
    %583 = vmatprep.subr.mxu0 0.0
    %584 = vmatpush1.msra.mxu0 0.0
    %585 = vmatprep.subr.mxu0 0.0
    %586 = vmatpush1.msra.mxu0 0.0
    %587 = vmatprep.subr.mxu0 0.0
    %588 = vmatpush1.msra.mxu0 0.0
    %589 = vmatprep.subr.mxu0 0.0
    %590 = vmatpush1.msra.mxu0 0.0
    %591 = vmatprep.subr.mxu0 0.0
    %592 = vmatpush1.msra.mxu0 0.0
    %593 = vmatprep.subr.mxu0 0.0
    %594 = vmatpush1.msra.mxu0 0.0
    %595 = vmatprep.subr.mxu0 0.0
    %596 = vmatpush1.msra.mxu0 0.0
    %597 = vmatprep.subr.mxu0 0.0
    %598 = vmatpush1.msra.mxu0 0.0
    %599 = vmatprep.subr.mxu0 0.0
    %600 = vmatpush1.msra.mxu0 0.0
    %601 = vmatprep.subr.mxu0 0.0
    %602 = vmatpush1.msra.mxu0 0.0
    %603 = vmatprep.subr.mxu0 0.0
    %604 = vmatpush1.msra.mxu0 0.0
    %605 = vmatprep.subr.mxu0 0.0
    %606 = vmatpush1.msra.mxu0 0.0
    %607 = vmatprep.subr.mxu0 0.0
    %608 = vmatpush1.msra.mxu0 %v43
    %609 = vmatprep.subr.mxu0 0.0
    %610 = vmatpush1.msra.mxu0 %v42
    %611 = vmatprep.subr.mxu0 0.0
    %612 = vmatpush1.msra.mxu0 %v41
    %613 = vmatprep.subr.mxu0 0.0
    %614 = vmatpush1.msra.mxu0 %v40
    %615 = vmatprep.subr.mxu0 0.0
    %616 = vmatpush2.msra.mxu0 0.0
    %617 = vmatprep.subr.mxu0 0.0
    %618 = vmatpush2.msra.mxu0 0.0
    %619 = vmatprep.subr.mxu0 0.0
    %620 = vmatpush2.msra.mxu0 0.0
    %621 = vmatprep.subr.mxu0 0.0
    %622 = vmatpush2.msra.mxu0 0.0
    %623 = vmatprep.subr.mxu0 0.0
    %624 = vmatpush2.msra.mxu0 0.0
    %625 = vmatprep.subr.mxu0 0.0
    %626 = vmatpush2.msra.mxu0 0.0
    %627 = vmatprep.subr.mxu0 0.0
    %628 = vmatpush2.msra.mxu0 0.0
    %629 = vmatprep.subr.mxu0 0.0
    %630 = vmatpush2.msra.mxu0 0.0
    %631 = vmatprep.subr.mxu0 0.0
    %632 = vmatpush2.msra.mxu0 0.0
    %633 = vmatprep.subr.mxu0 0.0
    %634 = vmatpush2.msra.mxu0 0.0
    %635 = vmatprep.subr.mxu0 0.0
    %636 = vmatpush2.msra.mxu0 0.0
    %637 = vmatprep.subr.mxu0 0.0
    %638 = vmatpush2.msra.mxu0 0.0
    %639 = vmatprep.subr.mxu0 0.0
    %640 = vmatpush2.msra.mxu0 0.0
    %641 = vmatprep.subr.mxu0 0.0
    %642 = vmatpush2.msra.mxu0 0.0
    %643 = vmatprep.subr.mxu0 0.0
    %644 = vmatpush2.msra.mxu0 0.0
    %645 = vmatprep.subr.mxu0 0.0
    %646 = vmatpush2.msra.mxu0 0.0
    %647 = vmatprep.mubr.f32.mxu0 0.0
    %648 = vmatmul.mubr.f32.gmra.mxu0 %v581
    %v649 = vpop.f32.mrf.mxu0
    %v650 = vadd.f32 0.0, %v649
    %v651 = vpop.f32.mrf.mxu0
    %652 = vdwg.mxu0
    %v653 = vadd.f32 %v39, %v650
    %654 = vst.msk [vmem:[#allocation5 + $0x7] sm:$0x1] %vm45, %v653
    %v655 = vld [vmem:[#allocation2] sm:$0xff]
    %v656 = vld [vmem:[#allocation5] sm:$0xff]
    %v657 = vld [vmem:[%s3] sm:$0xff]
    %v658 = vld [vmem:[%s1] sm:$0x1]
    %v659 = vld [vmem:[%s5] sm:$0xff]
    %v660 = vld [vmem:[%s5 + $0x8] sm:$0xff]
    %v661 = vld [vmem:[%s5 + $0x10] sm:$0xff]
    %v662 = vld [vmem:[%s5 + $0x18] sm:$0xff]
    %v663 = vld [vmem:[%s5 + $0x20] sm:$0xff]
    %v664 = vld [vmem:[%s5 + $0x28] sm:$0xff]
    %v665 = vld [vmem:[%s5 + $0x30] sm:$0xff]
    %v666 = vld [vmem:[%s5 + $0x38] sm:$0x7]
    %vm667 = vcmask 482304
    %v669 = vsel %vm667, %v657, 0
    %vm671 = vcmask 1042432
    %v673 = vsel %vm671, %v666, 0
    %675 = vmatprep.subr.mxu0 0.0
    %676 = vmatpush1.msra.mxu0 0.0
    %677 = vmatprep.subr.mxu0 0.0
    %678 = vmatpush1.msra.mxu0 0.0
    %679 = vmatprep.subr.mxu0 0.0
    %680 = vmatpush1.msra.mxu0 0.0
    %681 = vmatprep.subr.mxu0 0.0
    %682 = vmatpush1.msra.mxu0 0.0
    %683 = vmatprep.subr.mxu0 0.0
    %684 = vmatpush1.msra.mxu0 0.0
    %685 = vmatprep.subr.mxu0 0.0
    %686 = vmatpush1.msra.mxu0 0.0
    %687 = vmatprep.subr.mxu0 0.0
    %688 = vmatpush1.msra.mxu0 0.0
    %689 = vmatprep.subr.mxu0 0.0
    %690 = vmatpush1.msra.mxu0 0.0
    %691 = vmatprep.subr.mxu0 0.0
    %692 = vmatpush1.msra.mxu0 %v673
    %693 = vmatprep.subr.mxu0 0.0
    %694 = vmatpush1.msra.mxu0 %v665
    %695 = vmatprep.subr.mxu0 0.0
    %696 = vmatpush1.msra.mxu0 %v664
    %697 = vmatprep.subr.mxu0 0.0
    %698 = vmatpush1.msra.mxu0 %v663
    %699 = vmatprep.subr.mxu0 0.0
    %700 = vmatpush1.msra.mxu0 %v662
    %701 = vmatprep.subr.mxu0 0.0
    %702 = vmatpush1.msra.mxu0 %v661
    %703 = vmatprep.subr.mxu0 0.0
    %704 = vmatpush1.msra.mxu0 %v660
    %705 = vmatprep.subr.mxu0 0.0
    %706 = vmatpush1.msra.mxu0 %v659
    %707 = vmatprep.subr.mxu0 0.0
    %708 = vmatpush2.msra.mxu0 0.0
    %709 = vmatprep.subr.mxu0 0.0
    %710 = vmatpush2.msra.mxu0 0.0
    %711 = vmatprep.subr.mxu0 0.0
    %712 = vmatpush2.msra.mxu0 0.0
    %713 = vmatprep.subr.mxu0 0.0
    %714 = vmatpush2.msra.mxu0 0.0
    %715 = vmatprep.subr.mxu0 0.0
    %716 = vmatpush2.msra.mxu0 0.0
    %717 = vmatprep.subr.mxu0 0.0
    %718 = vmatpush2.msra.mxu0 0.0
    %719 = vmatprep.subr.mxu0 0.0
    %720 = vmatpush2.msra.mxu0 0.0
    %721 = vmatprep.subr.mxu0 0.0
    %722 = vmatpush2.msra.mxu0 0.0
    %723 = vmatprep.subr.mxu0 0.0
    %724 = vmatpush2.msra.mxu0 0.0
    %725 = vmatprep.subr.mxu0 0.0
    %726 = vmatpush2.msra.mxu0 0.0
    %727 = vmatprep.subr.mxu0 0.0
    %728 = vmatpush2.msra.mxu0 0.0
    %729 = vmatprep.subr.mxu0 0.0
    %730 = vmatpush2.msra.mxu0 0.0
    %731 = vmatprep.subr.mxu0 0.0
    %732 = vmatpush2.msra.mxu0 0.0
    %733 = vmatprep.subr.mxu0 0.0
    %734 = vmatpush2.msra.mxu0 0.0
    %735 = vmatprep.subr.mxu0 0.0
    %736 = vmatpush2.msra.mxu0 0.0
    %737 = vmatprep.subr.mxu0 0.0
    %738 = vmatpush2.msra.mxu0 0.0
    %739 = vmatprep.mubr.f32.mxu0 0.0
    %740 = vmatmul.mubr.f32.gmra.mxu0 %v669
    %v741 = vpop.f32.mrf.mxu0
    %v742 = vadd.f32 0.0, %v741
    %v743 = vpop.f32.mrf.mxu0
    %744 = vdwg.mxu0
    %v746 = vlaneseq
    %v747 = vshrl.u32 %v746, 7
    %v748 = vsub.s32 0, %v747
    %v749 = vrot.slane %v658, %v748
    %v751 = vadd.f32 %v749, %v742
    %v752 = vld [vmem:[%s6] sm:$0xff]
    %v753 = vld [vmem:[%s6 + $0x8] sm:$0xff]
    %v754 = vld [vmem:[%s6 + $0x10] sm:$0xff]
    %v755 = vld [vmem:[%s6 + $0x18] sm:$0xff]
    %v757 = vsel %vm47, %v655, 0
    %759 = vmatprep.subr.mxu0 0.0
    %760 = vmatpush1.msra.mxu0 0.0
    %761 = vmatprep.subr.mxu0 0.0
    %762 = vmatpush1.msra.mxu0 0.0
    %763 = vmatprep.subr.mxu0 0.0
    %764 = vmatpush1.msra.mxu0 0.0
    %765 = vmatprep.subr.mxu0 0.0
    %766 = vmatpush1.msra.mxu0 0.0
    %767 = vmatprep.subr.mxu0 0.0
    %768 = vmatpush1.msra.mxu0 0.0
    %769 = vmatprep.subr.mxu0 0.0
    %770 = vmatpush1.msra.mxu0 0.0
    %771 = vmatprep.subr.mxu0 0.0
    %772 = vmatpush1.msra.mxu0 0.0
    %773 = vmatprep.subr.mxu0 0.0
    %774 = vmatpush1.msra.mxu0 0.0
    %775 = vmatprep.subr.mxu0 0.0
    %776 = vmatpush1.msra.mxu0 0.0
    %777 = vmatprep.subr.mxu0 0.0
    %778 = vmatpush1.msra.mxu0 0.0
    %779 = vmatprep.subr.mxu0 0.0
    %780 = vmatpush1.msra.mxu0 0.0
    %781 = vmatprep.subr.mxu0 0.0
    %782 = vmatpush1.msra.mxu0 0.0
    %783 = vmatprep.subr.mxu0 0.0
    %784 = vmatpush1.msra.mxu0 %v755
    %785 = vmatprep.subr.mxu0 0.0
    %786 = vmatpush1.msra.mxu0 %v754
    %787 = vmatprep.subr.mxu0 0.0
    %788 = vmatpush1.msra.mxu0 %v753
    %789 = vmatprep.subr.mxu0 0.0
    %790 = vmatpush1.msra.mxu0 %v752
    %791 = vmatprep.subr.mxu0 0.0
    %792 = vmatpush2.msra.mxu0 0.0
    %793 = vmatprep.subr.mxu0 0.0
    %794 = vmatpush2.msra.mxu0 0.0
    %795 = vmatprep.subr.mxu0 0.0
    %796 = vmatpush2.msra.mxu0 0.0
    %797 = vmatprep.subr.mxu0 0.0
    %798 = vmatpush2.msra.mxu0 0.0
    %799 = vmatprep.subr.mxu0 0.0
    %800 = vmatpush2.msra.mxu0 0.0
    %801 = vmatprep.subr.mxu0 0.0
    %802 = vmatpush2.msra.mxu0 0.0
    %803 = vmatprep.subr.mxu0 0.0
    %804 = vmatpush2.msra.mxu0 0.0
    %805 = vmatprep.subr.mxu0 0.0
    %806 = vmatpush2.msra.mxu0 0.0
    %807 = vmatprep.subr.mxu0 0.0
    %808 = vmatpush2.msra.mxu0 0.0
    %809 = vmatprep.subr.mxu0 0.0
    %810 = vmatpush2.msra.mxu0 0.0
    %811 = vmatprep.subr.mxu0 0.0
    %812 = vmatpush2.msra.mxu0 0.0
    %813 = vmatprep.subr.mxu0 0.0
    %814 = vmatpush2.msra.mxu0 0.0
    %815 = vmatprep.subr.mxu0 0.0
    %816 = vmatpush2.msra.mxu0 0.0
    %817 = vmatprep.subr.mxu0 0.0
    %818 = vmatpush2.msra.mxu0 0.0
    %819 = vmatprep.subr.mxu0 0.0
    %820 = vmatpush2.msra.mxu0 0.0
    %821 = vmatprep.subr.mxu0 0.0
    %822 = vmatpush2.msra.mxu0 0.0
    %823 = vmatprep.mubr.f32.mxu0 0.0
    %824 = vmatmul.mubr.f32.gmra.mxu0 %v757
    %v825 = vpop.f32.mrf.mxu0
    %v826 = vadd.f32 0.0, %v825
    %v827 = vpop.f32.mrf.mxu0
    %828 = vdwg.mxu0
    %v829 = vadd.f32 %v751, %v826
    %v830 = vld [vmem:[%s7] sm:$0xff]
    %v831 = vld [vmem:[%s7 + $0x8] sm:$0xff]
    %v832 = vld [vmem:[%s7 + $0x10] sm:$0xff]
    %v833 = vld [vmem:[%s7 + $0x18] sm:$0xff]
    %v834 = vld [vmem:[%s8] sm:$0xff]
    %v835 = vld [vmem:[%s8 + $0x8] sm:$0xff]
    %vm836 = vcmask 130048
    %v838 = vsel %vm836, %v829, 0
    %840 = vmatprep.subr.mxu0 0.0
    %841 = vmatpush1.msra.mxu0 0.0
    %842 = vmatprep.subr.mxu0 0.0
    %843 = vmatpush1.msra.mxu0 0.0
    %844 = vmatprep.subr.mxu0 0.0
    %845 = vmatpush1.msra.mxu0 0.0
    %846 = vmatprep.subr.mxu0 0.0
    %847 = vmatpush1.msra.mxu0 0.0
    %848 = vmatprep.subr.mxu0 0.0
    %849 = vmatpush1.msra.mxu0 0.0
    %850 = vmatprep.subr.mxu0 0.0
    %851 = vmatpush1.msra.mxu0 0.0
    %852 = vmatprep.subr.mxu0 0.0
    %853 = vmatpush1.msra.mxu0 0.0
    %854 = vmatprep.subr.mxu0 0.0
    %855 = vmatpush1.msra.mxu0 0.0
    %856 = vmatprep.subr.mxu0 0.0
    %857 = vmatpush1.msra.mxu0 0.0
    %858 = vmatprep.subr.mxu0 0.0
    %859 = vmatpush1.msra.mxu0 0.0
    %860 = vmatprep.subr.mxu0 0.0
    %861 = vmatpush1.msra.mxu0 0.0
    %862 = vmatprep.subr.mxu0 0.0
    %863 = vmatpush1.msra.mxu0 0.0
    %864 = vmatprep.subr.mxu0 0.0
    %865 = vmatpush1.msra.mxu0 0.0
    %866 = vmatprep.subr.mxu0 0.0
    %867 = vmatpush1.msra.mxu0 0.0
    %868 = vmatprep.subr.mxu0 0.0
    %869 = vmatpush1.msra.mxu0 %v835
    %870 = vmatprep.subr.mxu0 0.0
    %871 = vmatpush1.msra.mxu0 %v834
    %872 = vmatprep.subr.mxu0 0.0
    %873 = vmatpush2.msra.mxu0 0.0
    %874 = vmatprep.subr.mxu0 0.0
    %875 = vmatpush2.msra.mxu0 0.0
    %876 = vmatprep.subr.mxu0 0.0
    %877 = vmatpush2.msra.mxu0 0.0
    %878 = vmatprep.subr.mxu0 0.0
    %879 = vmatpush2.msra.mxu0 0.0
    %880 = vmatprep.subr.mxu0 0.0
    %881 = vmatpush2.msra.mxu0 0.0
    %882 = vmatprep.subr.mxu0 0.0
    %883 = vmatpush2.msra.mxu0 0.0
    %884 = vmatprep.subr.mxu0 0.0
    %885 = vmatpush2.msra.mxu0 0.0
    %886 = vmatprep.subr.mxu0 0.0
    %887 = vmatpush2.msra.mxu0 0.0
    %888 = vmatprep.subr.mxu0 0.0
    %889 = vmatpush2.msra.mxu0 0.0
    %890 = vmatprep.subr.mxu0 0.0
    %891 = vmatpush2.msra.mxu0 0.0
    %892 = vmatprep.subr.mxu0 0.0
    %893 = vmatpush2.msra.mxu0 0.0
    %894 = vmatprep.subr.mxu0 0.0
    %895 = vmatpush2.msra.mxu0 0.0
    %896 = vmatprep.subr.mxu0 0.0
    %897 = vmatpush2.msra.mxu0 0.0
    %898 = vmatprep.subr.mxu0 0.0
    %899 = vmatpush2.msra.mxu0 0.0
    %900 = vmatprep.subr.mxu0 0.0
    %901 = vmatpush2.msra.mxu0 0.0
    %902 = vmatprep.subr.mxu0 0.0
    %903 = vmatpush2.msra.mxu0 0.0
    %904 = vmatprep.mubr.f32.mxu0 0.0
    %905 = vmatmul.mubr.f32.gmra.mxu0 %v838
    %v906 = vpop.f32.mrf.mxu0
    %v907 = vadd.f32 0.0, %v906
    %v908 = vpop.f32.mrf.mxu0
    %909 = vdwg.mxu0
    %v911 = vsel %vm47, %v656, 0
    %913 = vmatprep.subr.mxu0 0.0
    %914 = vmatpush1.msra.mxu0 0.0
    %915 = vmatprep.subr.mxu0 0.0
    %916 = vmatpush1.msra.mxu0 0.0
    %917 = vmatprep.subr.mxu0 0.0
    %918 = vmatpush1.msra.mxu0 0.0
    %919 = vmatprep.subr.mxu0 0.0
    %920 = vmatpush1.msra.mxu0 0.0
    %921 = vmatprep.subr.mxu0 0.0
    %922 = vmatpush1.msra.mxu0 0.0
    %923 = vmatprep.subr.mxu0 0.0
    %924 = vmatpush1.msra.mxu0 0.0
    %925 = vmatprep.subr.mxu0 0.0
    %926 = vmatpush1.msra.mxu0 0.0
    %927 = vmatprep.subr.mxu0 0.0
    %928 = vmatpush1.msra.mxu0 0.0
    %929 = vmatprep.subr.mxu0 0.0
    %930 = vmatpush1.msra.mxu0 0.0
    %931 = vmatprep.subr.mxu0 0.0
    %932 = vmatpush1.msra.mxu0 0.0
    %933 = vmatprep.subr.mxu0 0.0
    %934 = vmatpush1.msra.mxu0 0.0
    %935 = vmatprep.subr.mxu0 0.0
    %936 = vmatpush1.msra.mxu0 0.0
    %937 = vmatprep.subr.mxu0 0.0
    %938 = vmatpush1.msra.mxu0 %v833
    %939 = vmatprep.subr.mxu0 0.0
    %940 = vmatpush1.msra.mxu0 %v832
    %941 = vmatprep.subr.mxu0 0.0
    %942 = vmatpush1.msra.mxu0 %v831
    %943 = vmatprep.subr.mxu0 0.0
    %944 = vmatpush1.msra.mxu0 %v830
    %945 = vmatprep.subr.mxu0 0.0
    %946 = vmatpush2.msra.mxu0 0.0
    %947 = vmatprep.subr.mxu0 0.0
    %948 = vmatpush2.msra.mxu0 0.0
    %949 = vmatprep.subr.mxu0 0.0
    %950 = vmatpush2.msra.mxu0 0.0
    %951 = vmatprep.subr.mxu0 0.0
    %952 = vmatpush2.msra.mxu0 0.0
    %953 = vmatprep.subr.mxu0 0.0
    %954 = vmatpush2.msra.mxu0 0.0
    %955 = vmatprep.subr.mxu0 0.0
    %956 = vmatpush2.msra.mxu0 0.0
    %957 = vmatprep.subr.mxu0 0.0
    %958 = vmatpush2.msra.mxu0 0.0
    %959 = vmatprep.subr.mxu0 0.0
    %960 = vmatpush2.msra.mxu0 0.0
    %961 = vmatprep.subr.mxu0 0.0
    %962 = vmatpush2.msra.mxu0 0.0
    %963 = vmatprep.subr.mxu0 0.0
    %964 = vmatpush2.msra.mxu0 0.0
    %965 = vmatprep.subr.mxu0 0.0
    %966 = vmatpush2.msra.mxu0 0.0
    %967 = vmatprep.subr.mxu0 0.0
    %968 = vmatpush2.msra.mxu0 0.0
    %969 = vmatprep.subr.mxu0 0.0
    %970 = vmatpush2.msra.mxu0 0.0
    %971 = vmatprep.subr.mxu0 0.0
    %972 = vmatpush2.msra.mxu0 0.0
    %973 = vmatprep.subr.mxu0 0.0
    %974 = vmatpush2.msra.mxu0 0.0
    %975 = vmatprep.subr.mxu0 0.0
    %976 = vmatpush2.msra.mxu0 0.0
    %977 = vmatprep.mubr.f32.mxu0 0.0
    %978 = vmatmul.mubr.f32.gmra.mxu0 %v911
    %v979 = vpop.f32.mrf.mxu0
    %v980 = vadd.f32 %v907, %v979
    %v981 = vpop.f32.mrf.mxu0
    %982 = vdwg.mxu0
    %v983 = vld [vmem:[%s9] sm:$0x1]
    %v985 = vlaneseq
    %v986 = vshrl.u32 %v985, 7
    %v987 = vsub.s32 0, %v986
    %v988 = vrot.slane %v983, %v987
    %v990 = vadd.f32 %v980, %v988
    %v991 = vsel %vm836, %v990, -inf
    %992 = vmax.xlane.f32.xlu0 %v991
    %v993 = vpop.xlane.xlu0 %992
    %v994 = vsub.f32 %v990, %v993
    %v995 = vmul.f32 %v994, 1.442695
    %v996 = vpow.pop %v995
    %v997 = vsel %vm836, %v996, 0.0
    %998 = vadd.xlane.f32.xlu0 %v997
    %v999 = vpop.xlane.xlu0 %998
    %v1000 = vlog2.pop %v999
    %v1001 = vmul.f32 %v1000, 0.6931472
    %v1002 = vsub.f32 %v994, %v1001
    %1003 = vst.msk [vmem:[#allocation3] sm:$0xff] %vm836, %v1002
    // Predicated region
    $region42: #{_iii_rnn_sequence.1} parent=1 // pred_check
      _
    $region43: #{_iii_rnn_sequence.1} parent=1 // pred_check_branch
      %1005 = sbr.rel (0) target = $region45
    $region44: #{_iii_rnn_sequence.1} parent=1 // pred_region
      %s1007 = ssub.s32 128, 128
      %1008 = vsyncadd [#allocation4], %s1007
      %s1010 = sshll.u32 [#allocation3], 4
      %s1011 = int_to_ptr.vmem [resolvable:$true] %s1010
      %1013 = dma.vmem_to_hbm [thread:$0]  %s1011, 128, %s10, [#allocation4]
    $region45: #{_iii_rnn_sequence.1} parent=1 // pred_fallthru
      _
    // Predicated region
    $region46: #{_iii_rnn_sequence.1} parent=1 // pred_check
      _
    $region47: #{_iii_rnn_sequence.1} parent=1 // pred_check_branch
      %1015 = sbr.rel (0) target = $region49
    $region48: #{_iii_rnn_sequence.1} parent=1 // pred_region
      %s1017 = ssub.s32 128, 128
      %1018 = vsyncadd [#allocation6], %s1017
      %s1020 = sshll.u32 [#allocation5], 4
      %s1021 = int_to_ptr.vmem [resolvable:$true] %s1020
      %1023 = dma.vmem_to_hbm [thread:$0]  %s1021, 128, %s11, [#allocation6]
    $region49: #{_iii_rnn_sequence.1} parent=1 // pred_fallthru
      _
    // Predicated region
    $region50: #{_iii_rnn_sequence.1} parent=1 // pred_check
      _
    $region51: #{_iii_rnn_sequence.1} parent=1 // pred_check_branch
      %1025 = sbr.rel (0) target = $region53
    $region52: #{_iii_rnn_sequence.1} parent=1 // pred_region
      %1026 = dma.done [#allocation4], 128
    $region53: #{_iii_rnn_sequence.1} parent=1 // pred_fallthru
      _
    // Predicated region
    $region54: #{_iii_rnn_sequence.1} parent=1 // pred_check
      _
    $region55: #{_iii_rnn_sequence.1} parent=1 // pred_check_branch
      %1028 = sbr.rel (0) target = $region57
    $region56: #{_iii_rnn_sequence.1} parent=1 // pred_region
      %1029 = dma.done [#allocation6], 128
    $region57: #{_iii_rnn_sequence.1} parent=1 // pred_fallthru
      _
    %1030 = vsyncpa [#allocation4], 1
    %1031 = vsyncpa [#allocation6], 1

</llo_original>
